<compile_context>
chip_gen: v6e
topology: v6e:2x2x1
jax: 0.10.0
libtpu: 0.0.40
codegen_flags: <defaults>
</compile_context>

<pallas_src>
import jax
import jax.numpy as jnp
from jax.experimental import pallas as pl
from jax.experimental.pallas import tpu as pltpu


def _mish_kernel(x_ref, o_ref):
    x = x_ref[...].astype(jnp.float32)
    # tanh(softplus(x)) = (e^{2x} + 2 e^x) / (e^{2x} + 2 e^x + 2)
    # With t = exp(-|x|) in (0, 1]:
    #   x >= 0:  (1 + 2t)   / (1 + 2t + 2t^2)
    #   x <  0:  (t^2 + 2t) / (t^2 + 2t + 2)
    t = jnp.exp(-jnp.abs(x))                 # single EUP transcendental
    t2 = t * t
    pos = x >= 0.0
    a = jnp.where(pos, 1.0, t2)
    b = jnp.where(pos, t2, 1.0)
    numer = a + 2.0 * t
    denom = numer + 2.0 * b                  # denom in [2, 5] -> always safe
    r = pl.reciprocal(denom, approx=True)    # EUP vrcp (separate VLIW slot)
    r = r * (2.0 - denom * r)                # Newton refinement on the VPU
    r = r * (2.0 - denom * r)                # -> full f32 accuracy
    o_ref[...] = (x * numer * r).astype(o_ref.dtype)


def _round_up(a: int, b: int) -> int:
    return ((a + b - 1) // b) * b


def mish(x: jax.Array, *, target_block_bytes: int = 2 * 1024 * 1024) -> jax.Array:
    orig_shape = x.shape
    orig_dtype = x.dtype
    n = x.size
    if n == 0:
        return x

    itemsize = int(jnp.dtype(orig_dtype).itemsize)
    # native sublane packing: 8 rows (f32), 16 (bf16/f16), 32 (int8/fp8)
    sublane = max(8, 32 // max(itemsize, 1))
    lane = 128

    # Wide, lane-dense slab width (large multiple of 128 => unmasked full-width
    # stores).  Prefer widths that divide n exactly so no padding is needed.
    width = lane
    for cand in (2048, 1024, 512, 256):
        if n % cand == 0 and n // cand >= sublane:
            width = cand
            break

    rows = pl.cdiv(n, width)

    # Block rows: ~target_block_bytes per block, multiple of the sublane packing.
    target_rows = max(
        sublane, (target_block_bytes // (width * itemsize)) // sublane * sublane
    )
    tm = min(target_rows, _round_up(rows, sublane))
    # Keep >= ~8 grid steps when there is enough work (lets Mosaic shard the
    # "parallel" axis across both v7x TensorCores), without dropping below
    # ~512 KiB per block.
    min_rows = max(sublane, (512 * 1024) // (width * itemsize))
    while rows // tm < 8 and tm % (2 * sublane) == 0 and tm // 2 >= min_rows:
        tm //= 2

    rows_padded = _round_up(rows, tm)
    n_padded = rows_padded * width

    x_flat = jnp.reshape(x, (-1,))
    if n_padded != n:
        # Only taken when n does not tile cleanly; mish(0) == 0, so zero pad is safe.
        x_flat = jnp.pad(x_flat, (0, n_padded - n))
    x2d = jnp.reshape(x_flat, (rows_padded, width))

    grid = (rows_padded // tm,)

    out2d = pl.pallas_call(
        _mish_kernel,
        out_shape=jax.ShapeDtypeStruct((rows_padded, width), orig_dtype),
        grid_spec=pltpu.PrefetchScalarGridSpec(
            num_scalar_prefetch=0,
            grid=grid,
            in_specs=[pl.BlockSpec((tm, width), lambda i: (i, 0))],
            out_specs=pl.BlockSpec((tm, width), lambda i: (i, 0)),
        ),
        compiler_params=pltpu.CompilerParams(
            dimension_semantics=("parallel",),
            # 2 input + 2 output buffers x ~2 MiB block = ~8 MiB: fits v5e's
            # 16 MiB scoped default and v7x's 32-of-64 MiB; set explicitly.
            vmem_limit_bytes=32 * 1024 * 1024,
        ),
    )(x2d)

    out_flat = jnp.reshape(out2d, (-1,))
    if n_padded != n:
        out_flat = out_flat[:n]
    return jnp.reshape(out_flat, orig_shape)


if __name__ == "__main__":
    key = jax.random.PRNGKey(0)
    x = jax.random.normal(key, (2, 4, 16, 16), dtype=jnp.float32)  # NCHW

    y = jax.jit(mish)(x)
    jax.block_until_ready(y)

    # reference check (pure JAX)
    ref = x * jnp.tanh(jax.nn.softplus(x))
    assert y.shape == x.shape and y.dtype == x.dtype
    assert jnp.allclose(y, ref, atol=2e-5, rtol=2e-5)

    print("KERNEL_OK")
</pallas_src>

<mosaic_0001>
module attributes {stable_mosaic.version = 11 : i64} {
  func.func @_mish_kernel(%arg0: i32, %arg1: memref<8x256xf32, #tpu.memory_space<vmem>>, %arg2: memref<8x256xf32, #tpu.memory_space<vmem>>) attributes {dimension_semantics = [#tpu.dimension_semantics<parallel>], iteration_bounds = array<i64: 1>, scalar_prefetch = 0 : i64, scratch_operands = 0 : i64, tpu.core_type = #tpu.core_type<tc>, window_params = [{transform_indices = @transform_0, window_bounds = array<i64: 8, 256>}, {transform_indices = @transform_1, window_bounds = array<i64: 8, 256>}]} {
    %c0 = arith.constant 0 : index
    %c0_0 = arith.constant 0 : index
    %0 = vector.load %arg1[%c0, %c0_0] : memref<8x256xf32, #tpu.memory_space<vmem>>, vector<8x256xf32>
    %1 = math.absf %0 : vector<8x256xf32>
    %cst = arith.constant 0.000000e+00 : f32
    %2 = vector.broadcast %cst : f32 to vector<8x256xf32>
    %3 = arith.subf %2, %1 : vector<8x256xf32>
    %4 = math.exp %3 : vector<8x256xf32>
    %5 = arith.mulf %4, %4 : vector<8x256xf32>
    %cst_1 = arith.constant 0.000000e+00 : f32
    %6 = vector.broadcast %cst_1 : f32 to vector<8x256xf32>
    %7 = arith.cmpf oge, %0, %6 : vector<8x256xf32>
    %cst_2 = arith.constant 1.000000e+00 : f32
    %8 = vector.broadcast %cst_2 : f32 to vector<8x256xf32>
    %9 = arith.select %7, %8, %5 : vector<8x256xi1>, vector<8x256xf32>
    %cst_3 = arith.constant 1.000000e+00 : f32
    %10 = vector.broadcast %cst_3 : f32 to vector<8x256xf32>
    %11 = arith.select %7, %5, %10 : vector<8x256xi1>, vector<8x256xf32>
    %cst_4 = arith.constant 2.000000e+00 : f32
    %12 = vector.broadcast %cst_4 : f32 to vector<8x256xf32>
    %13 = arith.mulf %12, %4 : vector<8x256xf32>
    %14 = arith.addf %9, %13 : vector<8x256xf32>
    %cst_5 = arith.constant 2.000000e+00 : f32
    %15 = vector.broadcast %cst_5 : f32 to vector<8x256xf32>
    %16 = arith.mulf %15, %11 : vector<8x256xf32>
    %17 = arith.addf %14, %16 : vector<8x256xf32>
    %18 = tpu.reciprocal %17 {approx = true} : vector<8x256xf32> -> vector<8x256xf32>
    %19 = arith.mulf %17, %18 : vector<8x256xf32>
    %cst_6 = arith.constant 2.000000e+00 : f32
    %20 = vector.broadcast %cst_6 : f32 to vector<8x256xf32>
    %21 = arith.subf %20, %19 : vector<8x256xf32>
    %22 = arith.mulf %18, %21 : vector<8x256xf32>
    %23 = arith.mulf %17, %22 : vector<8x256xf32>
    %cst_7 = arith.constant 2.000000e+00 : f32
    %24 = vector.broadcast %cst_7 : f32 to vector<8x256xf32>
    %25 = arith.subf %24, %23 : vector<8x256xf32>
    %26 = arith.mulf %22, %25 : vector<8x256xf32>
    %27 = arith.mulf %0, %14 : vector<8x256xf32>
    %28 = arith.mulf %27, %26 : vector<8x256xf32>
    %c0_8 = arith.constant 0 : index
    %c0_9 = arith.constant 0 : index
    %29 = vector.load %arg2[%c0_8, %c0_9] : memref<8x256xf32, #tpu.memory_space<vmem>>, vector<8x256xf32>
    tpu.vector_store %arg2[%c0_8, %c0_9], %28 {strides = array<i32>} : memref<8x256xf32, #tpu.memory_space<vmem>>, vector<8x256xf32>,
    return
  }
  func.func @transform_0(%arg0: i32) -> (i32, i32) {
    %c0_i32 = arith.constant 0 : i32
    %c0_i32_0 = arith.constant 0 : i32
    return %arg0, %c0_i32 : i32, i32
  }
  func.func @transform_1(%arg0: i32) -> (i32, i32) {
    %c0_i32 = arith.constant 0 : i32
    %c0_i32_0 = arith.constant 0 : i32
    return %arg0, %c0_i32 : i32, i32
  }
}

</mosaic_0001>

<llo_original>
// kernel: mish.1
$region0: #{mish.1}
  #allocation0 [shape = 'u32[]', space=smem, size = 0x4, offset = 0x4, fixed_abs, tag = 'smem constant byte address 0x4 - core index']
  #allocation1 [shape = 'u32[144,128]{1,0:T(1,128)}', space=vmem, size = 0x12000, scoped, tag = 'internal scratch']
  %s0 = inlined_call_operand.vmem [shape: f32[8,256], index: 0, kind: input, shape index: {}]
  %s1 = inlined_call_operand.vmem [shape: f32[8,256], index: 1, kind: output, shape index: {}]
  %s2 = sld [smem:[#allocation0]]
  $region14: #{mish.1} parent=0
    _
  %s4 = ssub.s32 1, %s2
  %s5 = scalar_select 0, %s4, %s2
  // Predicated region
  $region2: #{mish.1} parent=0 // pred_check
    _
  $region3: #{mish.1} parent=0 // pred_check_branch
    %7 = sbr.rel (0) target = $region5
  $region4: #{mish.1} parent=0 // pred_region
    _
  $region5: #{mish.1} parent=0 // pred_fallthru
    _
  %v8 = vld [vmem:[%s0] sm:$0xff]
  %v9 = vld [vmem:[%s0 + $0x8] sm:$0xff]
  %v10 = vand.u32 2147483647, %v8
  %v11 = vand.u32 2147483647, %v9
  %v12 = vsub.f32 0.0, %v10
  %v13 = vsub.f32 0.0, %v11
  %v14 = vmul.f32 %v12, 1.442695
  %v15 = vpow.pop %v14
  %v16 = vmul.f32 %v13, 1.442695
  %v17 = vpow.pop %v16
  %v18 = vmul.f32 %v15, %v15
  %v19 = vmul.f32 %v17, %v17
  %vm20 = vcmp.ge.f32.partialorder %v8, 0.0
  %vm21 = vcmp.ge.f32.partialorder %v9, 0.0
  %v22 = vsel %vm20, 1.0, %v18
  %v23 = vsel %vm21, 1.0, %v19
  %v24 = vsel %vm20, %v18, 1.0
  %v25 = vsel %vm21, %v19, 1.0
  %v26 = vmul.f32 %v15, 2.0
  %v27 = vmul.f32 %v17, 2.0
  %v28 = vadd.f32 %v22, %v26
  %v29 = vadd.f32 %v23, %v27
  %v30 = vmul.f32 %v24, 2.0
  %v31 = vmul.f32 %v25, 2.0
  %v32 = vadd.f32 %v28, %v30
  %v33 = vadd.f32 %v29, %v31
  %v34 = vrcp.pop %v32
  %v35 = vrcp.pop %v33
  %v36 = vmul.f32 %v32, %v34
  %v37 = vmul.f32 %v33, %v35
  %v38 = vsub.f32 2.0, %v36
  %v39 = vsub.f32 2.0, %v37
  %v40 = vmul.f32 %v34, %v38
  %v41 = vmul.f32 %v35, %v39
  %v42 = vmul.f32 %v32, %v40
  %v43 = vmul.f32 %v33, %v41
  %v44 = vsub.f32 2.0, %v42
  %v45 = vsub.f32 2.0, %v43
  %v46 = vmul.f32 %v40, %v44
  %v47 = vmul.f32 %v41, %v45
  %v48 = vmul.f32 %v8, %v28
  %v49 = vmul.f32 %v9, %v29
  %v50 = vmul.f32 %v48, %v46
  %v51 = vmul.f32 %v49, %v47
  %52 = vst [vmem:[%s1] sm:$0xff] %v50
  %53 = vst [vmem:[%s1 + $0x8] sm:$0xff] %v51
  // Predicated region
  $region6: #{mish.1} parent=0 // pred_check
    _
  $region7: #{mish.1} parent=0 // pred_check_branch
    %55 = sbr.rel (0) target = $region9
  $region8: #{mish.1} parent=0 // pred_region
    _
  $region9: #{mish.1} parent=0 // pred_fallthru
    _
  // Predicated region
  $region10: #{mish.1} parent=0 // pred_check
    _
  $region11: #{mish.1} parent=0 // pred_check_branch
    %57 = sbr.rel (0) target = $region13
  $region12: #{mish.1} parent=0 // pred_region
    _
  $region13: #{mish.1} parent=0 // pred_fallthru
    _

</llo_original>
